<compile_context>
chip_gen: v7x
topology: tpu7x:2x2x1
jax: 0.10.0
libtpu: 0.0.40
codegen_flags: <defaults>
</compile_context>

<pallas_src>
import functools

import jax
import jax.numpy as jnp
from jax.experimental import pallas as pl
from jax.experimental.pallas import tpu as pltpu


def _round_up(x, m):
    return (x + m - 1) // m * m


def _cdiv(a, b):
    return -(-a // b)


def _cls_head_kernel(ts, seq_len, seq_ragged,       # static
                     feat_ref,      # (tb, ts, H)   features tile (input dtype, streamed)
                     mask_ref,      # (tb, ts, 1)   attention mask tile (f32, streamed)
                     wd_cls_ref,    # (H, H)        dense weight rows for CLS half (resident)
                     wd_emb_ref,    # (H, H)        dense weight rows for mean-pool half
                     bd_ref,        # (1, H)        dense bias
                     wo_ref,        # (H, Lp)       out_proj weight (label-padded)
                     bo_ref,        # (1, Lp)       out_proj bias
                     out_ref,       # (tb, Lp)      logits tile
                     cls_ref,       # scratch (tb, H) f32
                     sum_ref,       # scratch (tb, H) f32
                     cnt_ref):      # scratch (tb, 1) f32
    j = pl.program_id(1)
    ns = pl.num_programs(1)

    @pl.when(j == 0)
    def _init():
        f0 = feat_ref[:, 0, :].astype(jnp.float32)      # CLS = global position 0
        m0 = mask_ref[:, 0, :].astype(jnp.float32)      # (tb, 1)
        cls_ref[...] = f0
        # Pre-subtract the CLS contribution: the unconditional accumulate below adds
        # it back, so position 0 nets out of the masked-mean numerator (matches
        # (features * mask)[:, 1:, :].sum(1)) without a per-step iota/select.
        sum_ref[...] = -f0 * m0
        cnt_ref[...] = jnp.zeros_like(cnt_ref)

    feat = feat_ref[...]
    m = mask_ref[...].astype(jnp.float32)               # (tb, ts, 1)
    if seq_ragged:
        # Last seq tile reads past S: zero the out-of-bounds rows (they may contain
        # NaN/Inf garbage and 0 * NaN = NaN would poison the running sum).
        pos = j * ts + jax.lax.broadcasted_iota(jnp.int32, feat.shape, 1)
        feat = jnp.where(pos < seq_len, feat, jnp.zeros((), feat.dtype))
    feat = feat.astype(jnp.float32)

    sum_ref[...] += jnp.sum(feat * m, axis=1)            # (tb, H)
    cnt_ref[...] += jnp.sum(m, axis=1)                   # (tb, 1)

    @pl.when(j == ns - 1)
    def _finalize():
        denom = cnt_ref[...]
        # TODO(synk): the reference yields NaN/Inf for an all-zero attention-mask row;
        # this guard returns finite garbage instead (also hit on padded batch rows,
        # which are sliced away by the wrapper).
        denom = jnp.where(denom == 0.0, 1.0, denom)
        embs = sum_ref[...] * pl.reciprocal(denom, approx=True)
        x_cls = cls_ref[...]

        # TODO(synk): nn.Dropout is treated as identity (inference / eval mode).

        # dense([x_cls ; embs]) == x_cls @ Wd[:H, :] + embs @ Wd[H:, :]  (no concat)
        h = (jnp.dot(x_cls, wd_cls_ref[...].astype(jnp.float32),
                     preferred_element_type=jnp.float32)
             + jnp.dot(embs, wd_emb_ref[...].astype(jnp.float32),
                       preferred_element_type=jnp.float32)
             + bd_ref[...].astype(jnp.float32))
        h = jnp.tanh(h)
        logits = (jnp.dot(h, wo_ref[...].astype(jnp.float32),
                          preferred_element_type=jnp.float32)
                  + bo_ref[...].astype(jnp.float32))
        out_ref[...] = logits.astype(out_ref.dtype)


def prepare_head_params(params, hidden_size):
    """One-time (parameter-load-time) preprocessing, hoisted out of the hot path:
    split the joined dense weight into CLS / mean halves, pad out_proj to a
    lane-dense multiple of 128 labels."""
    H = hidden_size
    w_d = jnp.asarray(params["w_dense"])                 # (2H, H)  [in, out]
    b_d = jnp.asarray(params["b_dense"]).reshape(1, H)
    w_o = jnp.asarray(params["w_out"])                   # (H, L)   [in, out]
    L = w_o.shape[1]
    b_o = jnp.asarray(params["b_out"]).reshape(1, L)
    L_pad = _round_up(max(L, 1), 128)
    if L_pad != L:
        w_o = jnp.pad(w_o, ((0, 0), (0, L_pad - L)))
        b_o = jnp.pad(b_o, ((0, 0), (0, L_pad - L)))
    return {"wd_cls": w_d[:H], "wd_emb": w_d[H:], "b_dense": b_d,
            "w_out": w_o, "b_out": b_o, "num_labels": L}


def roberta_classification_head_joined(features, attention_mask, prepared,
                                       *, tb=None, ts=None):
    """features: [B, S, H] (f32 or bf16); attention_mask: [B, S].
    Returns logits [B, num_labels] (f32)."""
    B, S, H = features.shape
    L = prepared["num_labels"]
    L_pad = prepared["w_out"].shape[1]
    feat_bytes = jnp.dtype(features.dtype).itemsize

    # ---- sequence tile (streamed reduction axis, innermost / "arbitrary") --------
    if ts is None:
        ts = S if S <= 128 else 128
    else:
        ts = min(int(ts), S)
        if ts != S:
            ts = max(8, (ts // 8) * 8)       # second-to-last block dim must be 8-aligned
    ns = _cdiv(S, ts)
    seq_ragged = (S % ts) != 0
    S_pad = ns * ts

    # ---- batch tile (independent rows, "parallel" / megacore-shardable) ----------
    if tb is None:
        budget = 32 * 1024 * 1024            # double-buffered features-stream budget
        tb = max(8, min(128, budget // max(2 * ts * H * feat_bytes, 1)))
    tb = int(tb)
    if B >= 16:                              # keep >= 2 batch tiles for v7x's two TCs
        tb = min(tb, _round_up(_cdiv(B, 2), 8))
    if tb >= B:
        tb = B                               # single, exact batch tile
    else:
        tb = max(8, (tb // 8) * 8)           # uneven grid handles the batch remainder
    nb = _cdiv(B, tb)
    B_out = nb * tb

    # ---- mask: the only tensor touched in the wrapper (tiny [B, S]) --------------
    mask3 = attention_mask.astype(jnp.float32).reshape(B, S, 1)
    if S_pad != S:
        mask3 = jnp.pad(mask3, ((0, 0), (0, S_pad - S), (0, 0)))

    # ---- VMEM budget for the chosen tiles (double-buffered) ----------------------
    w_bytes = jnp.dtype(prepared["w_out"].dtype).itemsize
    est = (2 * tb * ts * H * feat_bytes                          # features stream
           + 2 * tb * _round_up(ts, 8) * 128 * 4                 # mask stream (lane-padded)
           + 2 * (2 * H * H + H + H * L_pad + L_pad) * w_bytes   # resident weights
           + 2 * tb * L_pad * 4                                  # logits tile
           + tb * (2 * H + 128) * 4)                             # scratch
    vmem_limit = int(min(60 * 2**20, max(16 * 2**20, est * 13 // 10 + (2 << 20))))

    kernel = functools.partial(_cls_head_kernel, ts, S, seq_ragged)

    out = pl.pallas_call(
        kernel,
        out_shape=jax.ShapeDtypeStruct((B_out, L_pad), jnp.float32),
        grid_spec=pltpu.PrefetchScalarGridSpec(
            num_scalar_prefetch=0,
            grid=(nb, ns),
            in_specs=[
                pl.BlockSpec((tb, ts, H), lambda i, j: (i, j, 0)),   # features (unpadded, streamed)
                pl.BlockSpec((tb, ts, 1), lambda i, j: (i, j, 0)),   # mask (seq-padded, tiny)
                pl.BlockSpec((H, H), lambda i, j: (0, 0)),           # dense W, CLS half (resident)
                pl.BlockSpec((H, H), lambda i, j: (0, 0)),           # dense W, mean half (resident)
                pl.BlockSpec((1, H), lambda i, j: (0, 0)),           # dense bias
                pl.BlockSpec((H, L_pad), lambda i, j: (0, 0)),       # out_proj W (label-padded)
                pl.BlockSpec((1, L_pad), lambda i, j: (0, 0)),       # out_proj bias
            ],
            out_specs=pl.BlockSpec((tb, L_pad), lambda i, j: (i, 0)),
            scratch_shapes=[pltpu.VMEM((tb, H), jnp.float32),        # CLS token
                            pltpu.VMEM((tb, H), jnp.float32),        # masked running sum
                            pltpu.VMEM((tb, 1), jnp.float32)],       # mask count
        ),
        compiler_params=pltpu.CompilerParams(
            dimension_semantics=("parallel", "arbitrary"),
            vmem_limit_bytes=vmem_limit),
    )(features, mask3, prepared["wd_cls"], prepared["wd_emb"], prepared["b_dense"],
      prepared["w_out"], prepared["b_out"])

    return out[:B, :L]


def _reference(features, attention_mask, params):
    B, S, H = features.shape
    x_cls = features[:, 0, :]
    mask = attention_mask.astype(jnp.float32).reshape(B, S, 1)
    embs = (features * mask)[:, 1:, :].sum(axis=1) / mask.sum(axis=1)
    x = jnp.concatenate([x_cls, embs], axis=1)
    x = jnp.tanh(x @ params["w_dense"] + params["b_dense"])
    return x @ params["w_out"] + params["b_out"]


if __name__ == "__main__":
    B, S, H, L = 2, 8, 32, 3

    key = jax.random.PRNGKey(0)
    k_feat, k_wd, k_bd, k_wo, k_bo, k_feat2 = jax.random.split(key, 6)

    features = jax.random.normal(k_feat, (B, S, H), dtype=jnp.float32)
    # deterministic attention mask: second example has a padded tail
    lengths = jnp.array([S, S - 3], dtype=jnp.int32)
    attention_mask = (jnp.arange(S)[None, :] < lengths[:, None]).astype(jnp.float32)

    params = {
        # nn.Linear(2H, H): torch weight (H, 2H) stored pre-transposed as (2H, H)
        "w_dense": 0.05 * jax.random.normal(k_wd, (2 * H, H), dtype=jnp.float32),
        "b_dense": 0.05 * jax.random.normal(k_bd, (H,), dtype=jnp.float32),
        # nn.Linear(H, L): torch weight (L, H) stored pre-transposed as (H, L)
        "w_out": 0.05 * jax.random.normal(k_wo, (H, L), dtype=jnp.float32),
        "b_out": 0.05 * jax.random.normal(k_bo, (L,), dtype=jnp.float32),
    }
    prepared = prepare_head_params(params, H)

    # --- main check: small exact-fit shapes -------------------------------------
    out = roberta_classification_head_joined(features, attention_mask, prepared)
    out = jax.block_until_ready(out)
    ref = _reference(features, attention_mask, params)
    assert out.shape == (B, L)
    assert jnp.allclose(out, ref, atol=1e-3, rtol=1e-3), "mismatch vs reference"

    # --- second check: ragged batch + ragged sequence (uneven grid, no feature
    #     padding, in-kernel pos<S gating) ----------------------------------------
    B2, S2 = 12, 20
    feat2 = jax.random.normal(k_feat2, (B2, S2, H), dtype=jnp.float32)
    len2 = (jnp.arange(B2) % S2) + 1
    mask2 = (jnp.arange(S2)[None, :] < len2[:, None]).astype(jnp.float32)
    out2 = jax.block_until_ready(
        roberta_classification_head_joined(feat2, mask2, prepared, tb=8, ts=8))
    ref2 = _reference(feat2, mask2, params)
    assert out2.shape == (B2, L)
    assert jnp.allclose(out2, ref2, atol=1e-3, rtol=1e-3), "ragged mismatch vs reference"

    print("KERNEL_OK")
</pallas_src>

<mosaic_0001>
module attributes {stable_mosaic.version = 11 : i64} {
  func.func @_cls_head_kernel(%arg0: i32, %arg1: i32, %arg2: memref<2x8x32xf32, #tpu.memory_space<vmem>>, %arg3: memref<2x8x1xf32, #tpu.memory_space<vmem>>, %arg4: memref<32x32xf32, #tpu.memory_space<vmem>>, %arg5: memref<32x32xf32, #tpu.memory_space<vmem>>, %arg6: memref<1x32xf32, #tpu.memory_space<vmem>>, %arg7: memref<32x128xf32, #tpu.memory_space<vmem>>, %arg8: memref<1x128xf32, #tpu.memory_space<vmem>>, %arg9: memref<2x128xf32, #tpu.memory_space<vmem>>, %arg10: memref<2x32xf32, #tpu.memory_space<vmem>>, %arg11: memref<2x32xf32, #tpu.memory_space<vmem>>, %arg12: memref<2x1xf32, #tpu.memory_space<vmem>>) attributes {dimension_semantics = [#tpu.dimension_semantics<parallel>, #tpu.dimension_semantics<arbitrary>], iteration_bounds = array<i64: 1, 1>, scalar_prefetch = 0 : i64, scratch_operands = 3 : i64, tpu.core_type = #tpu.core_type<tc>, window_params = [{transform_indices = @transform_0, window_bounds = array<i64: 2, 8, 32>}, {transform_indices = @transform_1, window_bounds = array<i64: 2, 8, 1>}, {pipeline_mode = #tpu.pipeline_mode<synchronous>, transform_indices = @transform_2, window_bounds = array<i64: 32, 32>}, {pipeline_mode = #tpu.pipeline_mode<synchronous>, transform_indices = @transform_3, window_bounds = array<i64: 32, 32>}, {pipeline_mode = #tpu.pipeline_mode<synchronous>, transform_indices = @transform_4, window_bounds = array<i64: 1, 32>}, {pipeline_mode = #tpu.pipeline_mode<synchronous>, transform_indices = @transform_5, window_bounds = array<i64: 32, 128>}, {pipeline_mode = #tpu.pipeline_mode<synchronous>, transform_indices = @transform_6, window_bounds = array<i64: 1, 128>}, {transform_indices = @transform_7, window_bounds = array<i64: 2, 128>}]} {
    %c0_i32 = arith.constant 0 : i32
    %0 = arith.cmpi eq, %arg1, %c0_i32 : i32
    %1 = arith.extui %0 : i1 to i32
    %c0_i32_0 = arith.constant 0 : i32
    %2 = arith.cmpi ne, %1, %c0_i32_0 : i32
    scf.if %2 {
      %c0_17 = arith.constant 0 : index
      %c0_18 = arith.constant 0 : index
      %c0_19 = arith.constant 0 : index
      %18 = vector.load %arg2[%c0_17, %c0_18, %c0_19] : memref<2x8x32xf32, #tpu.memory_space<vmem>>, vector<2x1x32xf32>
      %19 = vector.shape_cast %18 : vector<2x1x32xf32> to vector<2x32xf32>
      %c0_20 = arith.constant 0 : index
      %c0_21 = arith.constant 0 : index
      %c0_22 = arith.constant 0 : index
      %20 = vector.load %arg3[%c0_20, %c0_21, %c0_22] : memref<2x8x1xf32, #tpu.memory_space<vmem>>, vector<2x1x1xf32>
      %21 = vector.shape_cast %20 : vector<2x1x1xf32> to vector<2x1xf32>
      %c0_23 = arith.constant 0 : index
      %c0_24 = arith.constant 0 : index
      %22 = vector.load %arg10[%c0_23, %c0_24] : memref<2x32xf32, #tpu.memory_space<vmem>>, vector<2x32xf32>
      tpu.vector_store %arg10[%c0_23, %c0_24], %19 {strides = array<i32>} : memref<2x32xf32, #tpu.memory_space<vmem>>, vector<2x32xf32>,
      %cst_25 = arith.constant 0.000000e+00 : f32
      %23 = vector.broadcast %cst_25 : f32 to vector<2x32xf32>
      %24 = arith.subf %23, %19 : vector<2x32xf32>
      %25 = vector.broadcast %21 : vector<2x1xf32> to vector<2x32xf32>
      %26 = arith.mulf %24, %25 : vector<2x32xf32>
      %c0_26 = arith.constant 0 : index
      %c0_27 = arith.constant 0 : index
      %27 = vector.load %arg11[%c0_26, %c0_27] : memref<2x32xf32, #tpu.memory_space<vmem>>, vector<2x32xf32>
      tpu.vector_store %arg11[%c0_26, %c0_27], %26 {strides = array<i32>} : memref<2x32xf32, #tpu.memory_space<vmem>>, vector<2x32xf32>,
      %cst_28 = arith.constant 0.000000e+00 : f32
      %28 = vector.broadcast %cst_28 : f32 to vector<2x1xf32>
      %c0_29 = arith.constant 0 : index
      %c0_30 = arith.constant 0 : index
      %29 = vector.load %arg12[%c0_29, %c0_30] : memref<2x1xf32, #tpu.memory_space<vmem>>, vector<2x1xf32>
      tpu.vector_store %arg12[%c0_29, %c0_30], %28 {strides = array<i32>} : memref<2x1xf32, #tpu.memory_space<vmem>>, vector<2x1xf32>,
    } else {
    }
    %c0 = arith.constant 0 : index
    %c0_1 = arith.constant 0 : index
    %c0_2 = arith.constant 0 : index
    %3 = vector.load %arg2[%c0, %c0_1, %c0_2] : memref<2x8x32xf32, #tpu.memory_space<vmem>>, vector<2x8x32xf32>
    %c0_3 = arith.constant 0 : index
    %c0_4 = arith.constant 0 : index
    %c0_5 = arith.constant 0 : index
    %4 = vector.load %arg3[%c0_3, %c0_4, %c0_5] : memref<2x8x1xf32, #tpu.memory_space<vmem>>, vector<2x8x1xf32>
    %c0_6 = arith.constant 0 : index
    %c0_7 = arith.constant 0 : index
    %5 = vector.load %arg11[%c0_6, %c0_7] : memref<2x32xf32, #tpu.memory_space<vmem>>, vector<2x32xf32>
    %6 = vector.broadcast %4 : vector<2x8x1xf32> to vector<2x8x32xf32>
    %7 = arith.mulf %3, %6 : vector<2x8x32xf32>
    %cst = arith.constant dense<0.000000e+00> : vector<2x32xf32>
    %8 = vector.multi_reduction <add>, %7, %cst [1] : vector<2x8x32xf32> to vector<2x32xf32>
    %9 = arith.addf %5, %8 : vector<2x32xf32>
    %c0_8 = arith.constant 0 : index
    %c0_9 = arith.constant 0 : index
    %10 = vector.load %arg11[%c0_8, %c0_9] : memref<2x32xf32, #tpu.memory_space<vmem>>, vector<2x32xf32>
    tpu.vector_store %arg11[%c0_8, %c0_9], %9 {strides = array<i32>} : memref<2x32xf32, #tpu.memory_space<vmem>>, vector<2x32xf32>,
    %c0_10 = arith.constant 0 : index
    %c0_11 = arith.constant 0 : index
    %11 = vector.load %arg12[%c0_10, %c0_11] : memref<2x1xf32, #tpu.memory_space<vmem>>, vector<2x1xf32>
    %cst_12 = arith.constant dense<0.000000e+00> : vector<2x1xf32>
    %12 = vector.multi_reduction <add>, %4, %cst_12 [1] : vector<2x8x1xf32> to vector<2x1xf32>
    %13 = arith.addf %11, %12 : vector<2x1xf32>
    %c0_13 = arith.constant 0 : index
    %c0_14 = arith.constant 0 : index
    %14 = vector.load %arg12[%c0_13, %c0_14] : memref<2x1xf32, #tpu.memory_space<vmem>>, vector<2x1xf32>
    tpu.vector_store %arg12[%c0_13, %c0_14], %13 {strides = array<i32>} : memref<2x1xf32, #tpu.memory_space<vmem>>, vector<2x1xf32>,
    %c0_i32_15 = arith.constant 0 : i32
    %15 = arith.cmpi eq, %arg1, %c0_i32_15 : i32
    %16 = arith.extui %15 : i1 to i32
    %c0_i32_16 = arith.constant 0 : i32
    %17 = arith.cmpi ne, %16, %c0_i32_16 : i32
    scf.if %17 {
      %c0_17 = arith.constant 0 : index
      %c0_18 = arith.constant 0 : index
      %18 = vector.load %arg12[%c0_17, %c0_18] : memref<2x1xf32, #tpu.memory_space<vmem>>, vector<2x1xf32>
      %cst_19 = arith.constant 0.000000e+00 : f32
      %19 = vector.broadcast %cst_19 : f32 to vector<2x1xf32>
      %20 = arith.cmpf oeq, %18, %19 : vector<2x1xf32>
      %cst_20 = arith.constant 1.000000e+00 : f32
      %21 = vector.broadcast %cst_20 : f32 to vector<2x1xf32>
      %22 = arith.select %20, %21, %18 : vector<2x1xi1>, vector<2x1xf32>
      %c0_21 = arith.constant 0 : index
      %c0_22 = arith.constant 0 : index
      %23 = vector.load %arg11[%c0_21, %c0_22] : memref<2x32xf32, #tpu.memory_space<vmem>>, vector<2x32xf32>
      %24 = tpu.reciprocal %22 {approx = true} : vector<2x1xf32> -> vector<2x1xf32>
      %25 = vector.broadcast %24 : vector<2x1xf32> to vector<2x32xf32>
      %26 = arith.mulf %23, %25 : vector<2x32xf32>
      %c0_23 = arith.constant 0 : index
      %c0_24 = arith.constant 0 : index
      %27 = vector.load %arg10[%c0_23, %c0_24] : memref<2x32xf32, #tpu.memory_space<vmem>>, vector<2x32xf32>
      %c0_25 = arith.constant 0 : index
      %c0_26 = arith.constant 0 : index
      %28 = vector.load %arg4[%c0_25, %c0_26] : memref<32x32xf32, #tpu.memory_space<vmem>>, vector<32x32xf32>
      %cst_27 = arith.constant dense<0.000000e+00> : vector<2x32xf32>
      %29 = tpu.matmul %27, %28, %cst_27 {dimension_numbers = #tpu.dot_dimension_numbers<[1], [0], [0], [1], [0, 0, 1, 1], [], []>} : vector<2x32xf32>, vector<32x32xf32>, vector<2x32xf32> -> vector<2x32xf32>
      %c0_28 = arith.constant 0 : index
      %c0_29 = arith.constant 0 : index
      %30 = vector.load %arg5[%c0_28, %c0_29] : memref<32x32xf32, #tpu.memory_space<vmem>>, vector<32x32xf32>
      %cst_30 = arith.constant dense<0.000000e+00> : vector<2x32xf32>
      %31 = tpu.matmul %26, %30, %cst_30 {dimension_numbers = #tpu.dot_dimension_numbers<[1], [0], [0], [1], [0, 0, 1, 1], [], []>} : vector<2x32xf32>, vector<32x32xf32>, vector<2x32xf32> -> vector<2x32xf32>
      %32 = arith.addf %29, %31 : vector<2x32xf32>
      %c0_31 = arith.constant 0 : index
      %c0_32 = arith.constant 0 : index
      %33 = vector.load %arg6[%c0_31, %c0_32] : memref<1x32xf32, #tpu.memory_space<vmem>>, vector<1x32xf32>
      %34 = vector.broadcast %33 : vector<1x32xf32> to vector<2x32xf32>
      %35 = arith.addf %32, %34 : vector<2x32xf32>
      %36 = math.tanh %35 : vector<2x32xf32>
      %c0_33 = arith.constant 0 : index
      %c0_34 = arith.constant 0 : index
      %37 = vector.load %arg7[%c0_33, %c0_34] : memref<32x128xf32, #tpu.memory_space<vmem>>, vector<32x128xf32>
      %cst_35 = arith.constant dense<0.000000e+00> : vector<2x128xf32>
      %38 = tpu.matmul %36, %37, %cst_35 {dimension_numbers = #tpu.dot_dimension_numbers<[1], [0], [0], [1], [0, 0, 1, 1], [], []>} : vector<2x32xf32>, vector<32x128xf32>, vector<2x128xf32> -> vector<2x128xf32>
      %c0_36 = arith.constant 0 : index
      %c0_37 = arith.constant 0 : index
      %39 = vector.load %arg8[%c0_36, %c0_37] : memref<1x128xf32, #tpu.memory_space<vmem>>, vector<1x128xf32>
      %40 = vector.broadcast %39 : vector<1x128xf32> to vector<2x128xf32>
      %41 = arith.addf %38, %40 : vector<2x128xf32>
      %c0_38 = arith.constant 0 : index
      %c0_39 = arith.constant 0 : index
      %42 = vector.load %arg9[%c0_38, %c0_39] : memref<2x128xf32, #tpu.memory_space<vmem>>, vector<2x128xf32>
      tpu.vector_store %arg9[%c0_38, %c0_39], %41 {strides = array<i32>} : memref<2x128xf32, #tpu.memory_space<vmem>>, vector<2x128xf32>,
    } else {
    }
    return
  }
  func.func @transform_0(%arg0: i32, %arg1: i32) -> (i32, i32, i32) {
    %c0_i32 = arith.constant 0 : i32
    %c0_i32_0 = arith.constant 0 : i32
    return %arg0, %arg1, %c0_i32 : i32, i32, i32
  }
  func.func @transform_1(%arg0: i32, %arg1: i32) -> (i32, i32, i32) {
    %c0_i32 = arith.constant 0 : i32
    %c0_i32_0 = arith.constant 0 : i32
    return %arg0, %arg1, %c0_i32 : i32, i32, i32
  }
  func.func @transform_2(%arg0: i32, %arg1: i32) -> (i32, i32) {
    %c0_i32 = arith.constant 0 : i32
    %c0_i32_0 = arith.constant 0 : i32
    %c0_i32_1 = arith.constant 0 : i32
    return %c0_i32, %c0_i32_0 : i32, i32
  }
  func.func @transform_3(%arg0: i32, %arg1: i32) -> (i32, i32) {
    %c0_i32 = arith.constant 0 : i32
    %c0_i32_0 = arith.constant 0 : i32
    %c0_i32_1 = arith.constant 0 : i32
    return %c0_i32, %c0_i32_0 : i32, i32
  }
  func.func @transform_4(%arg0: i32, %arg1: i32) -> (i32, i32) {
    %c0_i32 = arith.constant 0 : i32
    %c0_i32_0 = arith.constant 0 : i32
    %c0_i32_1 = arith.constant 0 : i32
    return %c0_i32, %c0_i32_0 : i32, i32
  }
  func.func @transform_5(%arg0: i32, %arg1: i32) -> (i32, i32) {
    %c0_i32 = arith.constant 0 : i32
    %c0_i32_0 = arith.constant 0 : i32
    %c0_i32_1 = arith.constant 0 : i32
    return %c0_i32, %c0_i32_0 : i32, i32
  }
  func.func @transform_6(%arg0: i32, %arg1: i32) -> (i32, i32) {
    %c0_i32 = arith.constant 0 : i32
    %c0_i32_0 = arith.constant 0 : i32
    %c0_i32_1 = arith.constant 0 : i32
    return %c0_i32, %c0_i32_0 : i32, i32
  }
  func.func @transform_7(%arg0: i32, %arg1: i32) -> (i32, i32) {
    %c0_i32 = arith.constant 0 : i32
    %c0_i32_0 = arith.constant 0 : i32
    return %arg0, %c0_i32 : i32, i32
  }
}

</mosaic_0001>

<llo_original>
// kernel: tpu_custom_call.1
$region0: #{tpu_custom_call.1}
  #allocation0 [shape = 'u32[]', space=smem, size = 0x4, offset = 0x4, fixed_abs, tag = 'smem constant byte address 0x4 - core index']
  #allocation1 [shape = 'u32[144,128]{1,0:T(1,128)}', space=vmem, size = 0x12000, scoped, tag = 'internal scratch']
  #allocation2 [shape = 'f32[2,32]{1,0:T(2,128)}', space=vmem, size = 0x400, scoped, tag = 'scratch operand']
  #allocation3 [shape = 'f32[2,32]{1,0:T(2,128)}', space=vmem, size = 0x400, scoped, tag = 'scratch operand']
  #allocation4 [shape = 'f32[2,1]{1,0:T(2,128)}', space=vmem, size = 0x400, scoped, tag = 'scratch operand']
  %s0 = inlined_call_operand.hbm [shape: f32[2,8,32], index: 0, kind: input, shape index: {}]
  %s1 = inlined_call_operand.vmem [shape: f32[2,8,1], index: 1, kind: input, shape index: {}]
  %s2 = inlined_call_operand.hbm [shape: f32[32,32], index: 2, kind: input, shape index: {}]
  %s3 = inlined_call_operand.hbm [shape: f32[32,32], index: 3, kind: input, shape index: {}]
  %s4 = inlined_call_operand.vmem [shape: f32[1,32], index: 4, kind: input, shape index: {}]
  %s5 = inlined_call_operand.vmem [shape: f32[32,128], index: 5, kind: input, shape index: {}]
  %s6 = inlined_call_operand.vmem [shape: f32[1,128], index: 6, kind: input, shape index: {}]
  %s7 = inlined_call_operand.hbm [shape: f32[2,128], index: 7, kind: output, shape index: {}]
  %s8 = sld [smem:[#allocation0]]
  $region58: #{tpu_custom_call.1} parent=0
    _
  %s10 = ssub.s32 1, %s8
  %s11 = scalar_select 0, %s10, %s8
  $region1: #{tpu_custom_call.1} parent=0
    #allocation5 [shape = 'u8[8192]{0}', space=vmem, size = 0x2000, scoped, tag = 'input window, operand 0, single buffered']
    #allocation6 [shape = 's32[1]{0}', space=sflag, size = 0x4, scoped, tag = 'scoped memory for tpu_custom_call.1']
    #allocation7 [shape = 's32[1]{0}', space=sflag, size = 0x4, scoped, tag = 'scoped memory for tpu_custom_call.1']
    #allocation8 [shape = 'u8[16384]{0}', space=vmem, size = 0x4000, scoped, tag = 'input window, operand 2, single buffered']
    #allocation9 [shape = 's32[1]{0}', space=sflag, size = 0x4, scoped, tag = 'scoped memory for tpu_custom_call.1']
    #allocation10 [shape = 'u8[16384]{0}', space=vmem, size = 0x4000, scoped, tag = 'input window, operand 3, single buffered']
    #allocation11 [shape = 'u8[1024]{0}', space=vmem, size = 0x400, scoped, tag = 'output window, operand 0, single buffered']
    %12 = vsyncpa [#allocation6], 0
    %13 = vsyncpa [#allocation9], 0
    %14 = vsyncpa [#allocation7], 0
    // Predicated region
    $region2: #{tpu_custom_call.1} parent=1 // pred_check
      _
    $region3: #{tpu_custom_call.1} parent=1 // pred_check_branch
      %16 = sbr.rel (0) target = $region5
    $region4: #{tpu_custom_call.1} parent=1 // pred_region
      %s18 = ssub.s32 256, 256
      %19 = vsyncadd [#allocation6], %s18
      %s20 = sshll.u32 [#allocation5], 4
      %s21 = int_to_ptr.vmem [resolvable:$true] %s20
      %26 = dma.hbm_to_vmem [thread:$0]  %s0, 256, %s21, [#allocation6], 128, 128, 8
    $region5: #{tpu_custom_call.1} parent=1 // pred_fallthru
      _
    // Predicated region
    $region6: #{tpu_custom_call.1} parent=1 // pred_check
      _
    $region7: #{tpu_custom_call.1} parent=1 // pred_check_branch
      %28 = sbr.rel (0) target = $region9
    $region8: #{tpu_custom_call.1} parent=1 // pred_region
      _
    $region9: #{tpu_custom_call.1} parent=1 // pred_fallthru
      _
    // Predicated region
    $region10: #{tpu_custom_call.1} parent=1 // pred_check
      _
    $region11: #{tpu_custom_call.1} parent=1 // pred_check_branch
      %30 = sbr.rel (0) target = $region13
    $region12: #{tpu_custom_call.1} parent=1 // pred_region
      %s32 = ssub.s32 512, 512
      %33 = vsyncadd [#allocation9], %s32
      %s34 = sshll.u32 [#allocation8], 4
      %s35 = int_to_ptr.vmem [resolvable:$true] %s34
      %40 = dma.hbm_to_vmem [thread:$0]  %s2, 512, %s35, [#allocation9], 128, 128, 8
    $region13: #{tpu_custom_call.1} parent=1 // pred_fallthru
      _
    // Predicated region
    $region14: #{tpu_custom_call.1} parent=1 // pred_check
      _
    $region15: #{tpu_custom_call.1} parent=1 // pred_check_branch
      %42 = sbr.rel (0) target = $region17
    $region16: #{tpu_custom_call.1} parent=1 // pred_region
      %s44 = ssub.s32 512, 512
      %45 = vsyncadd [#allocation9], %s44
      %s46 = sshll.u32 [#allocation10], 4
      %s47 = int_to_ptr.vmem [resolvable:$true] %s46
      %52 = dma.hbm_to_vmem [thread:$0]  %s3, 512, %s47, [#allocation9], 128, 128, 8
    $region17: #{tpu_custom_call.1} parent=1 // pred_fallthru
      _
    // Predicated region
    $region18: #{tpu_custom_call.1} parent=1 // pred_check
      _
    $region19: #{tpu_custom_call.1} parent=1 // pred_check_branch
      %54 = sbr.rel (0) target = $region21
    $region20: #{tpu_custom_call.1} parent=1 // pred_region
      _
    $region21: #{tpu_custom_call.1} parent=1 // pred_fallthru
      _
    // Predicated region
    $region22: #{tpu_custom_call.1} parent=1 // pred_check
      _
    $region23: #{tpu_custom_call.1} parent=1 // pred_check_branch
      %56 = sbr.rel (0) target = $region25
    $region24: #{tpu_custom_call.1} parent=1 // pred_region
      _
    $region25: #{tpu_custom_call.1} parent=1 // pred_fallthru
      _
    // Predicated region
    $region26: #{tpu_custom_call.1} parent=1 // pred_check
      _
    $region27: #{tpu_custom_call.1} parent=1 // pred_check_branch
      %58 = sbr.rel (0) target = $region29
    $region28: #{tpu_custom_call.1} parent=1 // pred_region
      _
    $region29: #{tpu_custom_call.1} parent=1 // pred_fallthru
      _
    // Predicated region
    $region30: #{tpu_custom_call.1} parent=1 // pred_check
      _
    $region31: #{tpu_custom_call.1} parent=1 // pred_check_branch
      %60 = sbr.rel (0) target = $region33
    $region32: #{tpu_custom_call.1} parent=1 // pred_region
      %61 = dma.done [#allocation6], 256
    $region33: #{tpu_custom_call.1} parent=1 // pred_fallthru
      _
    // Predicated region
    $region34: #{tpu_custom_call.1} parent=1 // pred_check
      _
    $region35: #{tpu_custom_call.1} parent=1 // pred_check_branch
      %63 = sbr.rel (0) target = $region37
    $region36: #{tpu_custom_call.1} parent=1 // pred_region
      %64 = dma.done [#allocation9], 512
    $region37: #{tpu_custom_call.1} parent=1 // pred_fallthru
      _
    // Predicated region
    $region38: #{tpu_custom_call.1} parent=1 // pred_check
      _
    $region39: #{tpu_custom_call.1} parent=1 // pred_check_branch
      %66 = sbr.rel (0) target = $region41
    $region40: #{tpu_custom_call.1} parent=1 // pred_region
      %67 = dma.done [#allocation9], 512
    $region41: #{tpu_custom_call.1} parent=1 // pred_fallthru
      _
    %p68 = scmp.eq.s32.totalorder 0, 0
    // Predicated region
    $region42: #{tpu_custom_call.1} parent=1 // pred_check
      %p69 = pneg %p68
    $region43: #{tpu_custom_call.1} parent=1 // pred_check_branch
      %71 = sbr.rel (%p69) target = $region45
    $region44: #{tpu_custom_call.1} parent=1 // pred_region
      %v72 = vld [vmem:[#allocation5] sm:$0x1]
      %v73 = vld [vmem:[#allocation5 + $0x8] sm:$0x1]
      %v74 = vld [vmem:[%s1] sm:$0x1]
      %v75 = vld [vmem:[%s1 + $0x8] sm:$0x1]
      %v78 = vrot.slane %v73, 7
      %vm79 = vcmask 1041409
      %v80 = vsel %vm79, %v78, %v72
      %vm82 = vcmask 254976
      %83 = vst.msk [vmem:[#allocation2] sm:$0x3] %vm82, %v80
      %v84 = vsub.f32 0.0, %v72
      %v85 = vsub.f32 0.0, %v73
      %87 = vset.pattern.permute.xlu0 0
      %88 = vperm.xlu0 %87, %v74
      %v89 = vpop.permute.xlu0 %88
      %92 = vset.pattern.permute.xlu0 0
      %93 = vperm.xlu0 %92, %v75
      %v94 = vpop.permute.xlu0 %93
      %v96 = vmul.f32 %v84, %v89
      %v97 = vmul.f32 %v85, %v94
      %v100 = vrot.slane %v97, 7
      %v101 = vsel %vm79, %v100, %v96
      %103 = vst.msk [vmem:[#allocation3] sm:$0x3] %vm82, %v101
      %vm104 = vcmask 1024
      %105 = vst.msk [vmem:[#allocation4] sm:$0x3] %vm104, 0.0
    $region45: #{tpu_custom_call.1} parent=1 // pred_fallthru
      _
    %v106 = vld [vmem:[#allocation5] sm:$0xff]
    %v107 = vld [vmem:[#allocation5 + $0x8] sm:$0xff]
    %v108 = vld [vmem:[%s1] sm:$0xff]
    %v109 = vld [vmem:[%s1 + $0x8] sm:$0xff]
    %v110 = vld [vmem:[#allocation3] sm:$0x3]
    %112 = vset.pattern.permute.xlu0 0
    %113 = vperm.xlu0 %112, %v108
    %v114 = vpop.permute.xlu0 %113
    %117 = vset.pattern.permute.xlu0 0
    %118 = vperm.xlu0 %117, %v109
    %v119 = vpop.permute.xlu0 %118
    %v121 = vmul.f32 %v106, %v114
    %v122 = vmul.f32 %v107, %v119
    %vm123 = vcmask 261120
    %v124 = vsel %vm123, %v121, 0.0
    %v125 = vrot.slane %v124, 4
    %v126 = vadd.f32 %v124, %v125
    %v127 = vrot.slane %v126, 2
    %v128 = vadd.f32 %v126, %v127
    %v129 = vrot.slane %v128, 1
    %v130 = vadd.f32 %v128, %v129
    %v131 = vsel %vm123, %v122, 0.0
    %v132 = vrot.slane %v131, 4
    %v133 = vadd.f32 %v131, %v132
    %v134 = vrot.slane %v133, 2
    %v135 = vadd.f32 %v133, %v134
    %v136 = vrot.slane %v135, 1
    %v137 = vadd.f32 %v135, %v136
    %vm140 = vcmask 1041409
    %v141 = vsel %vm140, %v137, %v130
    %v143 = vadd.f32 %v110, %v141
    %vm144 = vcmask 254976
    %145 = vst.msk [vmem:[#allocation3] sm:$0x3] %vm144, %v143
    %v146 = vld [vmem:[#allocation4] sm:$0x3]
    %vm147 = vcmask 7168
    %v148 = vsel %vm147, %v108, 0.0
    %v149 = vrot.slane %v148, 4
    %v150 = vadd.f32 %v148, %v149
    %v151 = vrot.slane %v150, 2
    %v152 = vadd.f32 %v150, %v151
    %v153 = vrot.slane %v152, 1
    %v154 = vadd.f32 %v152, %v153
    %v155 = vsel %vm147, %v109, 0.0
    %v156 = vrot.slane %v155, 4
    %v157 = vadd.f32 %v155, %v156
    %v158 = vrot.slane %v157, 2
    %v159 = vadd.f32 %v157, %v158
    %v160 = vrot.slane %v159, 1
    %v161 = vadd.f32 %v159, %v160
    %v164 = vsel %vm140, %v161, %v154
    %v166 = vadd.f32 %v146, %v164
    %vm167 = vcmask 1024
    %168 = vst.msk [vmem:[#allocation4] sm:$0x3] %vm167, %v166
    // Predicated region
    $region46: #{tpu_custom_call.1} parent=1 // pred_check
      %p169 = pneg %p68
    $region47: #{tpu_custom_call.1} parent=1 // pred_check_branch
      %171 = sbr.rel (%p169) target = $region49
    $region48: #{tpu_custom_call.1} parent=1 // pred_region
      %v172 = vld [vmem:[#allocation4] sm:$0x3]
      %vm173 = vcmp.eq.f32.partialorder %v172, 0.0
      %v174 = vsel %vm173, 1.0, %v172
      %v175 = vld [vmem:[#allocation3] sm:$0x3]
      %v176 = vrcp.pop %v174
      %178 = vset.pattern.permute.xlu0 0
      %179 = vperm.xlu0 %178, %v176
      %v180 = vpop.permute.xlu0 %179
      %v182 = vmul.f32 %v175, %v180
      %v183 = vld [vmem:[#allocation2] sm:$0x3]
      %v184 = vld [vmem:[#allocation8] sm:$0xff]
      %v185 = vld [vmem:[#allocation8 + $0x8] sm:$0xff]
      %v186 = vld [vmem:[#allocation8 + $0x10] sm:$0xff]
      %v187 = vld [vmem:[#allocation8 + $0x18] sm:$0xff]
      %v188 = vld [vmem:[#allocation10] sm:$0xff]
      %v189 = vld [vmem:[#allocation10 + $0x8] sm:$0xff]
      %v190 = vld [vmem:[#allocation10 + $0x10] sm:$0xff]
      %v191 = vld [vmem:[#allocation10 + $0x18] sm:$0xff]
      %v193 = vsel %vm123, %v182, 0
      %195 = vmatprep.subr.mxu0 0.0
      %196 = vmatpush1.msra.mxu0 %v188
      %197 = vmatprep.subr.mxu0 0.0
      %198 = vmatpush1.msra.mxu0 %v189
      %199 = vmatprep.subr.mxu0 0.0
      %200 = vmatpush1.msra.mxu0 %v190
      %201 = vmatprep.subr.mxu0 0.0
      %202 = vmatpush1.msra.mxu0 %v191
      %203 = vmatprep.subr.mxu0 0.0
      %204 = vmatpush1.msra.mxu0 0.0
      %205 = vmatprep.subr.mxu0 0.0
      %206 = vmatpush1.msra.mxu0 0.0
      %207 = vmatprep.subr.mxu0 0.0
      %208 = vmatpush1.msra.mxu0 0.0
      %209 = vmatprep.subr.mxu0 0.0
      %210 = vmatpush1.msra.mxu0 0.0
      %211 = vmatprep.subr.mxu0 0.0
      %212 = vmatpush1.msra.mxu0 0.0
      %213 = vmatprep.subr.mxu0 0.0
      %214 = vmatpush1.msra.mxu0 0.0
      %215 = vmatprep.subr.mxu0 0.0
      %216 = vmatpush1.msra.mxu0 0.0
      %217 = vmatprep.subr.mxu0 0.0
      %218 = vmatpush1.msra.mxu0 0.0
      %219 = vmatprep.subr.mxu0 0.0
      %220 = vmatpush1.msra.mxu0 0.0
      %221 = vmatprep.subr.mxu0 0.0
      %222 = vmatpush1.msra.mxu0 0.0
      %223 = vmatprep.subr.mxu0 0.0
      %224 = vmatpush1.msra.mxu0 0.0
      %225 = vmatprep.subr.mxu0 0.0
      %226 = vmatpush1.msra.mxu0 0.0
      %227 = vmatprep.subr.mxu0 0.0
      %228 = vmatpush1.msra.mxu0 0.0
      %229 = vmatprep.subr.mxu0 0.0
      %230 = vmatpush1.msra.mxu0 0.0
      %231 = vmatprep.subr.mxu0 0.0
      %232 = vmatpush1.msra.mxu0 0.0
      %233 = vmatprep.subr.mxu0 0.0
      %234 = vmatpush1.msra.mxu0 0.0
      %235 = vmatprep.subr.mxu0 0.0
      %236 = vmatpush1.msra.mxu0 0.0
      %237 = vmatprep.subr.mxu0 0.0
      %238 = vmatpush1.msra.mxu0 0.0
      %239 = vmatprep.subr.mxu0 0.0
      %240 = vmatpush1.msra.mxu0 0.0
      %241 = vmatprep.subr.mxu0 0.0
      %242 = vmatpush1.msra.mxu0 0.0
      %243 = vmatprep.subr.mxu0 0.0
      %244 = vmatpush1.msra.mxu0 0.0
      %245 = vmatprep.subr.mxu0 0.0
      %246 = vmatpush1.msra.mxu0 0.0
      %247 = vmatprep.subr.mxu0 0.0
      %248 = vmatpush1.msra.mxu0 0.0
      %249 = vmatprep.subr.mxu0 0.0
      %250 = vmatpush1.msra.mxu0 0.0
      %251 = vmatprep.subr.mxu0 0.0
      %252 = vmatpush1.msra.mxu0 0.0
      %253 = vmatprep.subr.mxu0 0.0
      %254 = vmatpush1.msra.mxu0 0.0
      %255 = vmatprep.subr.mxu0 0.0
      %256 = vmatpush1.msra.mxu0 0.0
      %257 = vmatprep.subr.mxu0 0.0
      %258 = vmatpush1.msra.mxu0 0.0
      %259 = vmatprep.mubr.f32.mxu0 0.0
      %260 = vmatmul.mubr.f32.gmra.mrb[0].mxu0 %v193
      %v261 = vpop.f32.mrb[0].mxu0
      %v262 = vadd.f32 0.0, %v261
      %v263 = vpop.f32.mrb[0].mxu0
      %264 = vdwg.mxu0
      %v266 = vsel %vm123, %v183, 0
      %268 = vmatprep.subr.mxu0 0.0
      %269 = vmatpush1.msra.mxu0 %v184
      %270 = vmatprep.subr.mxu0 0.0
      %271 = vmatpush1.msra.mxu0 %v185
      %272 = vmatprep.subr.mxu0 0.0
      %273 = vmatpush1.msra.mxu0 %v186
      %274 = vmatprep.subr.mxu0 0.0
      %275 = vmatpush1.msra.mxu0 %v187
      %276 = vmatprep.subr.mxu0 0.0
      %277 = vmatpush1.msra.mxu0 0.0
      %278 = vmatprep.subr.mxu0 0.0
      %279 = vmatpush1.msra.mxu0 0.0
      %280 = vmatprep.subr.mxu0 0.0
      %281 = vmatpush1.msra.mxu0 0.0
      %282 = vmatprep.subr.mxu0 0.0
      %283 = vmatpush1.msra.mxu0 0.0
      %284 = vmatprep.subr.mxu0 0.0
      %285 = vmatpush1.msra.mxu0 0.0
      %286 = vmatprep.subr.mxu0 0.0
      %287 = vmatpush1.msra.mxu0 0.0
      %288 = vmatprep.subr.mxu0 0.0
      %289 = vmatpush1.msra.mxu0 0.0
      %290 = vmatprep.subr.mxu0 0.0
      %291 = vmatpush1.msra.mxu0 0.0
      %292 = vmatprep.subr.mxu0 0.0
      %293 = vmatpush1.msra.mxu0 0.0
      %294 = vmatprep.subr.mxu0 0.0
      %295 = vmatpush1.msra.mxu0 0.0
      %296 = vmatprep.subr.mxu0 0.0
      %297 = vmatpush1.msra.mxu0 0.0
      %298 = vmatprep.subr.mxu0 0.0
      %299 = vmatpush1.msra.mxu0 0.0
      %300 = vmatprep.subr.mxu0 0.0
      %301 = vmatpush1.msra.mxu0 0.0
      %302 = vmatprep.subr.mxu0 0.0
      %303 = vmatpush1.msra.mxu0 0.0
      %304 = vmatprep.subr.mxu0 0.0
      %305 = vmatpush1.msra.mxu0 0.0
      %306 = vmatprep.subr.mxu0 0.0
      %307 = vmatpush1.msra.mxu0 0.0
      %308 = vmatprep.subr.mxu0 0.0
      %309 = vmatpush1.msra.mxu0 0.0
      %310 = vmatprep.subr.mxu0 0.0
      %311 = vmatpush1.msra.mxu0 0.0
      %312 = vmatprep.subr.mxu0 0.0
      %313 = vmatpush1.msra.mxu0 0.0
      %314 = vmatprep.subr.mxu0 0.0
      %315 = vmatpush1.msra.mxu0 0.0
      %316 = vmatprep.subr.mxu0 0.0
      %317 = vmatpush1.msra.mxu0 0.0
      %318 = vmatprep.subr.mxu0 0.0
      %319 = vmatpush1.msra.mxu0 0.0
      %320 = vmatprep.subr.mxu0 0.0
      %321 = vmatpush1.msra.mxu0 0.0
      %322 = vmatprep.subr.mxu0 0.0
      %323 = vmatpush1.msra.mxu0 0.0
      %324 = vmatprep.subr.mxu0 0.0
      %325 = vmatpush1.msra.mxu0 0.0
      %326 = vmatprep.subr.mxu0 0.0
      %327 = vmatpush1.msra.mxu0 0.0
      %328 = vmatprep.subr.mxu0 0.0
      %329 = vmatpush1.msra.mxu0 0.0
      %330 = vmatprep.subr.mxu0 0.0
      %331 = vmatpush1.msra.mxu0 0.0
      %332 = vmatprep.mubr.f32.mxu0 0.0
      %333 = vmatmul.mubr.f32.gmra.mrb[0].mxu0 %v266
      %v334 = vpop.f32.mrb[0].mxu0
      %v335 = vadd.f32 %v262, %v334
      %v336 = vpop.f32.mrb[0].mxu0
      %337 = vdwg.mxu0
      %v338 = vld [vmem:[%s4] sm:$0x1]
      %v340 = vlaneseq
      %v341 = vshrl.u32 %v340, 7
      %v342 = vsub.s32 0, %v341
      %v343 = vrot.slane %v338, %v342
      %v345 = vadd.f32 %v335, %v343
      %v346 = vtanh.pop %v345
      %v347 = vld [vmem:[%s5] sm:$0xff]
      %v348 = vld [vmem:[%s5 + $0x8] sm:$0xff]
      %v349 = vld [vmem:[%s5 + $0x10] sm:$0xff]
      %v350 = vld [vmem:[%s5 + $0x18] sm:$0xff]
      %v351 = vld [vmem:[%s6] sm:$0x1]
      %v353 = vlaneseq
      %v354 = vshrl.u32 %v353, 7
      %v355 = vsub.s32 0, %v354
      %v356 = vrot.slane %v351, %v355
      %v359 = vsel %vm123, %v346, 0
      %361 = vmatprep.subr.mxu0 0.0
      %362 = vmatpush1.msra.mxu0 %v347
      %363 = vmatprep.subr.mxu0 0.0
      %364 = vmatpush1.msra.mxu0 %v348
      %365 = vmatprep.subr.mxu0 0.0
      %366 = vmatpush1.msra.mxu0 %v349
      %367 = vmatprep.subr.mxu0 0.0
      %368 = vmatpush1.msra.mxu0 %v350
      %369 = vmatprep.subr.mxu0 0.0
      %370 = vmatpush1.msra.mxu0 0.0
      %371 = vmatprep.subr.mxu0 0.0
      %372 = vmatpush1.msra.mxu0 0.0
      %373 = vmatprep.subr.mxu0 0.0
      %374 = vmatpush1.msra.mxu0 0.0
      %375 = vmatprep.subr.mxu0 0.0
      %376 = vmatpush1.msra.mxu0 0.0
      %377 = vmatprep.subr.mxu0 0.0
      %378 = vmatpush1.msra.mxu0 0.0
      %379 = vmatprep.subr.mxu0 0.0
      %380 = vmatpush1.msra.mxu0 0.0
      %381 = vmatprep.subr.mxu0 0.0
      %382 = vmatpush1.msra.mxu0 0.0
      %383 = vmatprep.subr.mxu0 0.0
      %384 = vmatpush1.msra.mxu0 0.0
      %385 = vmatprep.subr.mxu0 0.0
      %386 = vmatpush1.msra.mxu0 0.0
      %387 = vmatprep.subr.mxu0 0.0
      %388 = vmatpush1.msra.mxu0 0.0
      %389 = vmatprep.subr.mxu0 0.0
      %390 = vmatpush1.msra.mxu0 0.0
      %391 = vmatprep.subr.mxu0 0.0
      %392 = vmatpush1.msra.mxu0 0.0
      %393 = vmatprep.subr.mxu0 0.0
      %394 = vmatpush1.msra.mxu0 0.0
      %395 = vmatprep.subr.mxu0 0.0
      %396 = vmatpush1.msra.mxu0 0.0
      %397 = vmatprep.subr.mxu0 0.0
      %398 = vmatpush1.msra.mxu0 0.0
      %399 = vmatprep.subr.mxu0 0.0
      %400 = vmatpush1.msra.mxu0 0.0
      %401 = vmatprep.subr.mxu0 0.0
      %402 = vmatpush1.msra.mxu0 0.0
      %403 = vmatprep.subr.mxu0 0.0
      %404 = vmatpush1.msra.mxu0 0.0
      %405 = vmatprep.subr.mxu0 0.0
      %406 = vmatpush1.msra.mxu0 0.0
      %407 = vmatprep.subr.mxu0 0.0
      %408 = vmatpush1.msra.mxu0 0.0
      %409 = vmatprep.subr.mxu0 0.0
      %410 = vmatpush1.msra.mxu0 0.0
      %411 = vmatprep.subr.mxu0 0.0
      %412 = vmatpush1.msra.mxu0 0.0
      %413 = vmatprep.subr.mxu0 0.0
      %414 = vmatpush1.msra.mxu0 0.0
      %415 = vmatprep.subr.mxu0 0.0
      %416 = vmatpush1.msra.mxu0 0.0
      %417 = vmatprep.subr.mxu0 0.0
      %418 = vmatpush1.msra.mxu0 0.0
      %419 = vmatprep.subr.mxu0 0.0
      %420 = vmatpush1.msra.mxu0 0.0
      %421 = vmatprep.subr.mxu0 0.0
      %422 = vmatpush1.msra.mxu0 0.0
      %423 = vmatprep.subr.mxu0 0.0
      %424 = vmatpush1.msra.mxu0 0.0
      %425 = vmatprep.mubr.f32.mxu0 0.0
      %426 = vmatmul.mubr.f32.gmra.mrb[0].mxu0 %v359
      %v427 = vpop.f32.mrb[0].mxu0
      %v428 = vadd.f32 %v356, %v427
      %v429 = vpop.f32.mrb[0].mxu0
      %430 = vdwg.mxu0
      %431 = vst [vmem:[#allocation11] sm:$0x3] %v428
    $region49: #{tpu_custom_call.1} parent=1 // pred_fallthru
      _
    // Predicated region
    $region50: #{tpu_custom_call.1} parent=1 // pred_check
      _
    $region51: #{tpu_custom_call.1} parent=1 // pred_check_branch
      %433 = sbr.rel (0) target = $region53
    $region52: #{tpu_custom_call.1} parent=1 // pred_region
      %s435 = ssub.s32 32, 32
      %436 = vsyncadd [#allocation7], %s435
      %s438 = sshll.u32 [#allocation11], 4
      %s439 = int_to_ptr.vmem [resolvable:$true] %s438
      %441 = dma.vmem_to_hbm [thread:$0]  %s439, 32, %s7, [#allocation7]
    $region53: #{tpu_custom_call.1} parent=1 // pred_fallthru
      _
    // Predicated region
    $region54: #{tpu_custom_call.1} parent=1 // pred_check
      _
    $region55: #{tpu_custom_call.1} parent=1 // pred_check_branch
      %443 = sbr.rel (0) target = $region57
    $region56: #{tpu_custom_call.1} parent=1 // pred_region
      %444 = dma.done [#allocation7], 32
    $region57: #{tpu_custom_call.1} parent=1 // pred_fallthru
      _
    %445 = vsyncpa [#allocation6], 1
    %446 = vsyncpa [#allocation9], 1
    %447 = vsyncpa [#allocation7], 1

</llo_original>
